<compile_context>
chip_gen: v7x
topology: tpu7x:2x2x1
jax: 0.10.0
libtpu: 0.0.40
codegen_flags: <defaults>
</compile_context>

<pallas_src>
import functools

import jax
import jax.numpy as jnp
from jax.experimental import pallas as pl
from jax.experimental.pallas import tpu as pltpu


def _tp_embedding_kernel(ids_ref, w_hbm, out_ref, rowbuf, sems, *,
                         num_embeddings, block_size, tokens_per_tile):
    """Gather `tokens_per_tile` embedding rows for one (token-tile, shard) grid step."""
    t = pl.program_id(0)                  # token-tile index
    r = pl.program_id(1)                  # shard (rank) index
    vp1 = block_size + 1                  # rows per padded shard (incl. null row)
    min_id = r * block_size
    max_id = jnp.minimum(num_embeddings, (r + 1) * block_size)
    null_idx = block_size
    base = t * tokens_per_tile

    # Issue all row-gather DMAs (HBM -> VMEM) for this token tile, then wait.
    # Per-row semaphores let the DMAs overlap each other.
    for i in range(tokens_per_tile):
        tok = ids_ref[base + i]                               # scalar read from SMEM
        local = jnp.where((tok < min_id) | (tok >= max_id),
                          null_idx, tok - min_id)
        row = r * vp1 + local                                 # flat row in (ws*vp1, H)
        pltpu.make_async_copy(w_hbm.at[pl.ds(row, 1), :],
                              rowbuf.at[pl.ds(i, 1), :],
                              sems.at[i]).start()

    for i in range(tokens_per_tile):
        # Source only needs to match shape for the wait (see paged-attention pattern).
        pltpu.make_async_copy(w_hbm.at[pl.ds(0, 1), :],
                              rowbuf.at[pl.ds(i, 1), :],
                              sems.at[i]).wait()

    # Accumulate this shard's contribution directly into the resident output tile
    # (output index_map ignores the shard axis, so the block persists across r).
    @pl.when(r == 0)
    def _():
        out_ref[...] = jnp.zeros_like(out_ref)

    out_ref[...] += rowbuf[...].astype(out_ref.dtype)


def tensor_parallel_embedding(ids, sharded_weight, num_embeddings, reduce=True,
                              tokens_per_tile=8):
    """ids: (B, S) int32; sharded_weight: (world_size, block_size+1, H).

    For production shapes, raise tokens_per_tile (e.g. 256) — the VMEM footprint is
    just the (tokens_per_tile, H) output tile (double-buffered) plus one row buffer.
    bf16 weights also work (rowbuf follows the weight dtype); keep an f32 output if
    higher-precision accumulation across shards is needed.
    """
    world_size, vp1, hidden = sharded_weight.shape
    block_size = vp1 - 1
    orig_shape = ids.shape

    ids_flat = ids.reshape(-1).astype(jnp.int32)
    n = ids_flat.shape[0]
    n_pad = pl.cdiv(n, tokens_per_tile) * tokens_per_tile
    if n_pad != n:
        # Pad with a valid id; the extra output rows are sliced off below.
        ids_flat = jnp.pad(ids_flat, (0, n_pad - n))

    # View the weight as a flat row table; it stays in HBM (memory_space=pl.ANY) and
    # only the gathered rows are DMA'd, so reduce=False needs no sliced copy.
    w_flat = sharded_weight.reshape(world_size * vp1, hidden)

    num_shards = world_size if reduce else 1
    grid = (n_pad // tokens_per_tile, num_shards)

    kernel = functools.partial(
        _tp_embedding_kernel,
        num_embeddings=num_embeddings,
        block_size=block_size,
        tokens_per_tile=tokens_per_tile)

    out_flat = pl.pallas_call(
        kernel,
        out_shape=jax.ShapeDtypeStruct((n_pad, hidden), sharded_weight.dtype),
        grid_spec=pltpu.PrefetchScalarGridSpec(
            num_scalar_prefetch=1,                       # ids land in SMEM
            grid=grid,
            in_specs=[pl.BlockSpec(memory_space=pl.ANY)],  # weight stays in HBM
            out_specs=pl.BlockSpec((tokens_per_tile, hidden),
                                   lambda t, r, ids: (t, 0)),
            scratch_shapes=[
                pltpu.VMEM((tokens_per_tile, hidden), sharded_weight.dtype),
                pltpu.SemaphoreType.DMA((tokens_per_tile,)),
            ]),
        compiler_params=pltpu.CompilerParams(
            dimension_semantics=("parallel", "arbitrary")),
    )(ids_flat, w_flat)

    return out_flat[:n].reshape(*orig_shape, hidden)


def _reference(ids, sharded_weight, num_embeddings, reduce=True):
    world_size, vp1, hidden = sharded_weight.shape
    block_size = vp1 - 1
    out = jnp.zeros(ids.shape + (hidden,), sharded_weight.dtype)
    ranks = range(world_size) if reduce else range(1)
    for r in ranks:
        min_id = r * block_size
        max_id = min(num_embeddings, (r + 1) * block_size)
        local = jnp.where((ids < min_id) | (ids >= max_id),
                          block_size, ids - min_id)
        out = out + jnp.take(sharded_weight[r], local, axis=0)
    return out


if __name__ == "__main__":
    key = jax.random.PRNGKey(0)
    k_w, k_ids = jax.random.split(key)

    # Small, module-consistent shapes.
    num_embeddings = 64     # full vocab
    hidden = 32
    world_size = 2
    block_size = num_embeddings // world_size   # 32
    batch, seq = 2, 8

    # Deterministic full embedding table, sharded along dim 0, each shard padded
    # with one extra zero row (the "null" masking entry), matching __init__.
    full_weight = jax.random.normal(k_w, (num_embeddings, hidden), jnp.float32)
    shards = []
    for r in range(world_size):
        w_r = full_weight[r * block_size:(r + 1) * block_size]
        w_r = jnp.pad(w_r, ((0, 1), (0, 0)))     # F.pad(weight, (0, 0, 0, 1))
        shards.append(w_r)
    sharded_weight = jnp.stack(shards, axis=0)   # (world_size, block_size+1, H)

    ids = jax.random.randint(k_ids, (batch, seq), 0, num_embeddings, jnp.int32)

    # reduce=True path (all_reduce over shards simulated in-kernel).
    out = tensor_parallel_embedding(ids, sharded_weight, num_embeddings, reduce=True)
    out = jax.block_until_ready(out)
    ref = _reference(ids, sharded_weight, num_embeddings, reduce=True)
    assert out.shape == (batch, seq, hidden)
    assert jnp.allclose(out, ref, atol=1e-5, rtol=1e-5)

    # reduce=False path (rank-0 partial output).
    out0 = tensor_parallel_embedding(ids, sharded_weight, num_embeddings, reduce=False)
    out0 = jax.block_until_ready(out0)
    ref0 = _reference(ids, sharded_weight, num_embeddings, reduce=False)
    assert jnp.allclose(out0, ref0, atol=1e-5, rtol=1e-5)

    print("KERNEL_OK")
</pallas_src>

<mosaic_0001>
module attributes {stable_mosaic.version = 11 : i64} {
  func.func @_tp_embedding_kernel(%arg0: i32, %arg1: i32, %arg2: memref<16xi32, #tpu.memory_space<smem>>, %arg3: memref<66x32xf32, #tpu.memory_space<any>>, %arg4: memref<8x32xf32, #tpu.memory_space<vmem>>, %arg5: memref<8x32xf32, #tpu.memory_space<vmem>>, %arg6: memref<8x!tpu.dma_semaphore, #tpu.memory_space<semaphore_mem>>) attributes {dimension_semantics = [#tpu.dimension_semantics<parallel>, #tpu.dimension_semantics<arbitrary>], iteration_bounds = array<i64: 2, 2>, scalar_prefetch = 1 : i64, scratch_operands = 2 : i64, tpu.core_type = #tpu.core_type<tc>, window_params = [{}, {transform_indices = @transform_1, window_bounds = array<i64: 8, 32>}]} {
    %c32_i32 = arith.constant 32 : i32
    %0 = arith.muli %arg1, %c32_i32 : i32
    %c1_i32 = arith.constant 1 : i32
    %1 = arith.addi %arg1, %c1_i32 : i32
    %c32_i32_0 = arith.constant 32 : i32
    %2 = arith.muli %1, %c32_i32_0 : i32
    %c64_i32 = arith.constant 64 : i32
    %3 = arith.minsi %c64_i32, %2 : i32
    %c8_i32 = arith.constant 8 : i32
    %4 = arith.muli %arg0, %c8_i32 : i32
    %c0_i32 = arith.constant 0 : i32
    %5 = arith.addi %4, %c0_i32 : i32
    %6 = arith.index_cast %5 : i32 to index
    %7 = memref.load %arg2[%6] : memref<16xi32, #tpu.memory_space<smem>>
    %8 = arith.cmpi slt, %7, %0 : i32
    %9 = arith.cmpi sge, %7, %3 : i32
    %10 = arith.ori %8, %9 : i1
    %11 = arith.subi %7, %0 : i32
    %c32_i32_1 = arith.constant 32 : i32
    %12 = arith.select %10, %c32_i32_1, %11 : i32
    %c33_i32 = arith.constant 33 : i32
    %13 = arith.muli %arg1, %c33_i32 : i32
    %14 = arith.addi %13, %12 : i32
    %c0_i32_2 = arith.constant 0 : i32
    %c0_i32_3 = arith.constant 0 : i32
    %15 = tpu.memref_slice %arg3[%14, %c0_i32_3] : memref<66x32xf32, #tpu.memory_space<any>> -> memref<1x32xf32, #tpu.memory_space<any>>
    %c0_i32_4 = arith.constant 0 : i32
    %c0_i32_5 = arith.constant 0 : i32
    %16 = tpu.memref_slice %arg5[%c0_i32_4, %c0_i32_5] : memref<8x32xf32, #tpu.memory_space<vmem>> -> memref<1x32xf32, #tpu.memory_space<vmem>>
    %17 = tpu.memref_slice %arg6[%c0_i32_2] : memref<8x!tpu.dma_semaphore, #tpu.memory_space<semaphore_mem>> -> memref<1x!tpu.dma_semaphore, #tpu.memory_space<semaphore_mem>>
    %18 = tpu.memref_squeeze %17 : memref<1x!tpu.dma_semaphore, #tpu.memory_space<semaphore_mem>> -> memref<!tpu.dma_semaphore, #tpu.memory_space<semaphore_mem>>
    tpu.enqueue_dma source(%15 : memref<1x32xf32, #tpu.memory_space<any>>) target(%16 : memref<1x32xf32, #tpu.memory_space<vmem>>) target_semaphore(%18 : memref<!tpu.dma_semaphore, #tpu.memory_space<semaphore_mem>>)
    %c1_i32_6 = arith.constant 1 : i32
    %19 = arith.addi %4, %c1_i32_6 : i32
    %20 = arith.index_cast %19 : i32 to index
    %21 = memref.load %arg2[%20] : memref<16xi32, #tpu.memory_space<smem>>
    %22 = arith.cmpi slt, %21, %0 : i32
    %23 = arith.cmpi sge, %21, %3 : i32
    %24 = arith.ori %22, %23 : i1
    %25 = arith.subi %21, %0 : i32
    %c32_i32_7 = arith.constant 32 : i32
    %26 = arith.select %24, %c32_i32_7, %25 : i32
    %c33_i32_8 = arith.constant 33 : i32
    %27 = arith.muli %arg1, %c33_i32_8 : i32
    %28 = arith.addi %27, %26 : i32
    %c1_i32_9 = arith.constant 1 : i32
    %c0_i32_10 = arith.constant 0 : i32
    %29 = tpu.memref_slice %arg3[%28, %c0_i32_10] : memref<66x32xf32, #tpu.memory_space<any>> -> memref<1x32xf32, #tpu.memory_space<any>>
    %c1_i32_11 = arith.constant 1 : i32
    %c0_i32_12 = arith.constant 0 : i32
    %30 = tpu.memref_slice %arg5[%c1_i32_11, %c0_i32_12] : memref<8x32xf32, #tpu.memory_space<vmem>> -> memref<1x32xf32, #tpu.memory_space<vmem>>
    %31 = tpu.memref_slice %arg6[%c1_i32_9] : memref<8x!tpu.dma_semaphore, #tpu.memory_space<semaphore_mem>> -> memref<1x!tpu.dma_semaphore, #tpu.memory_space<semaphore_mem>>
    %32 = tpu.memref_squeeze %31 : memref<1x!tpu.dma_semaphore, #tpu.memory_space<semaphore_mem>> -> memref<!tpu.dma_semaphore, #tpu.memory_space<semaphore_mem>>
    tpu.enqueue_dma source(%29 : memref<1x32xf32, #tpu.memory_space<any>>) target(%30 : memref<1x32xf32, #tpu.memory_space<vmem>>) target_semaphore(%32 : memref<!tpu.dma_semaphore, #tpu.memory_space<semaphore_mem>>)
    %c2_i32 = arith.constant 2 : i32
    %33 = arith.addi %4, %c2_i32 : i32
    %34 = arith.index_cast %33 : i32 to index
    %35 = memref.load %arg2[%34] : memref<16xi32, #tpu.memory_space<smem>>
    %36 = arith.cmpi slt, %35, %0 : i32
    %37 = arith.cmpi sge, %35, %3 : i32
    %38 = arith.ori %36, %37 : i1
    %39 = arith.subi %35, %0 : i32
    %c32_i32_13 = arith.constant 32 : i32
    %40 = arith.select %38, %c32_i32_13, %39 : i32
    %c33_i32_14 = arith.constant 33 : i32
    %41 = arith.muli %arg1, %c33_i32_14 : i32
    %42 = arith.addi %41, %40 : i32
    %c2_i32_15 = arith.constant 2 : i32
    %c0_i32_16 = arith.constant 0 : i32
    %43 = tpu.memref_slice %arg3[%42, %c0_i32_16] : memref<66x32xf32, #tpu.memory_space<any>> -> memref<1x32xf32, #tpu.memory_space<any>>
    %c2_i32_17 = arith.constant 2 : i32
    %c0_i32_18 = arith.constant 0 : i32
    %44 = tpu.memref_slice %arg5[%c2_i32_17, %c0_i32_18] : memref<8x32xf32, #tpu.memory_space<vmem>> -> memref<1x32xf32, #tpu.memory_space<vmem>>
    %45 = tpu.memref_slice %arg6[%c2_i32_15] : memref<8x!tpu.dma_semaphore, #tpu.memory_space<semaphore_mem>> -> memref<1x!tpu.dma_semaphore, #tpu.memory_space<semaphore_mem>>
    %46 = tpu.memref_squeeze %45 : memref<1x!tpu.dma_semaphore, #tpu.memory_space<semaphore_mem>> -> memref<!tpu.dma_semaphore, #tpu.memory_space<semaphore_mem>>
    tpu.enqueue_dma source(%43 : memref<1x32xf32, #tpu.memory_space<any>>) target(%44 : memref<1x32xf32, #tpu.memory_space<vmem>>) target_semaphore(%46 : memref<!tpu.dma_semaphore, #tpu.memory_space<semaphore_mem>>)
    %c3_i32 = arith.constant 3 : i32
    %47 = arith.addi %4, %c3_i32 : i32
    %48 = arith.index_cast %47 : i32 to index
    %49 = memref.load %arg2[%48] : memref<16xi32, #tpu.memory_space<smem>>
    %50 = arith.cmpi slt, %49, %0 : i32
    %51 = arith.cmpi sge, %49, %3 : i32
    %52 = arith.ori %50, %51 : i1
    %53 = arith.subi %49, %0 : i32
    %c32_i32_19 = arith.constant 32 : i32
    %54 = arith.select %52, %c32_i32_19, %53 : i32
    %c33_i32_20 = arith.constant 33 : i32
    %55 = arith.muli %arg1, %c33_i32_20 : i32
    %56 = arith.addi %55, %54 : i32
    %c3_i32_21 = arith.constant 3 : i32
    %c0_i32_22 = arith.constant 0 : i32
    %57 = tpu.memref_slice %arg3[%56, %c0_i32_22] : memref<66x32xf32, #tpu.memory_space<any>> -> memref<1x32xf32, #tpu.memory_space<any>>
    %c3_i32_23 = arith.constant 3 : i32
    %c0_i32_24 = arith.constant 0 : i32
    %58 = tpu.memref_slice %arg5[%c3_i32_23, %c0_i32_24] : memref<8x32xf32, #tpu.memory_space<vmem>> -> memref<1x32xf32, #tpu.memory_space<vmem>>
    %59 = tpu.memref_slice %arg6[%c3_i32_21] : memref<8x!tpu.dma_semaphore, #tpu.memory_space<semaphore_mem>> -> memref<1x!tpu.dma_semaphore, #tpu.memory_space<semaphore_mem>>
    %60 = tpu.memref_squeeze %59 : memref<1x!tpu.dma_semaphore, #tpu.memory_space<semaphore_mem>> -> memref<!tpu.dma_semaphore, #tpu.memory_space<semaphore_mem>>
    tpu.enqueue_dma source(%57 : memref<1x32xf32, #tpu.memory_space<any>>) target(%58 : memref<1x32xf32, #tpu.memory_space<vmem>>) target_semaphore(%60 : memref<!tpu.dma_semaphore, #tpu.memory_space<semaphore_mem>>)
    %c4_i32 = arith.constant 4 : i32
    %61 = arith.addi %4, %c4_i32 : i32
    %62 = arith.index_cast %61 : i32 to index
    %63 = memref.load %arg2[%62] : memref<16xi32, #tpu.memory_space<smem>>
    %64 = arith.cmpi slt, %63, %0 : i32
    %65 = arith.cmpi sge, %63, %3 : i32
    %66 = arith.ori %64, %65 : i1
    %67 = arith.subi %63, %0 : i32
    %c32_i32_25 = arith.constant 32 : i32
    %68 = arith.select %66, %c32_i32_25, %67 : i32
    %c33_i32_26 = arith.constant 33 : i32
    %69 = arith.muli %arg1, %c33_i32_26 : i32
    %70 = arith.addi %69, %68 : i32
    %c4_i32_27 = arith.constant 4 : i32
    %c0_i32_28 = arith.constant 0 : i32
    %71 = tpu.memref_slice %arg3[%70, %c0_i32_28] : memref<66x32xf32, #tpu.memory_space<any>> -> memref<1x32xf32, #tpu.memory_space<any>>
    %c4_i32_29 = arith.constant 4 : i32
    %c0_i32_30 = arith.constant 0 : i32
    %72 = tpu.memref_slice %arg5[%c4_i32_29, %c0_i32_30] : memref<8x32xf32, #tpu.memory_space<vmem>> -> memref<1x32xf32, #tpu.memory_space<vmem>>
    %73 = tpu.memref_slice %arg6[%c4_i32_27] : memref<8x!tpu.dma_semaphore, #tpu.memory_space<semaphore_mem>> -> memref<1x!tpu.dma_semaphore, #tpu.memory_space<semaphore_mem>>
    %74 = tpu.memref_squeeze %73 : memref<1x!tpu.dma_semaphore, #tpu.memory_space<semaphore_mem>> -> memref<!tpu.dma_semaphore, #tpu.memory_space<semaphore_mem>>
    tpu.enqueue_dma source(%71 : memref<1x32xf32, #tpu.memory_space<any>>) target(%72 : memref<1x32xf32, #tpu.memory_space<vmem>>) target_semaphore(%74 : memref<!tpu.dma_semaphore, #tpu.memory_space<semaphore_mem>>)
    %c5_i32 = arith.constant 5 : i32
    %75 = arith.addi %4, %c5_i32 : i32
    %76 = arith.index_cast %75 : i32 to index
    %77 = memref.load %arg2[%76] : memref<16xi32, #tpu.memory_space<smem>>
    %78 = arith.cmpi slt, %77, %0 : i32
    %79 = arith.cmpi sge, %77, %3 : i32
    %80 = arith.ori %78, %79 : i1
    %81 = arith.subi %77, %0 : i32
    %c32_i32_31 = arith.constant 32 : i32
    %82 = arith.select %80, %c32_i32_31, %81 : i32
    %c33_i32_32 = arith.constant 33 : i32
    %83 = arith.muli %arg1, %c33_i32_32 : i32
    %84 = arith.addi %83, %82 : i32
    %c5_i32_33 = arith.constant 5 : i32
    %c0_i32_34 = arith.constant 0 : i32
    %85 = tpu.memref_slice %arg3[%84, %c0_i32_34] : memref<66x32xf32, #tpu.memory_space<any>> -> memref<1x32xf32, #tpu.memory_space<any>>
    %c5_i32_35 = arith.constant 5 : i32
    %c0_i32_36 = arith.constant 0 : i32
    %86 = tpu.memref_slice %arg5[%c5_i32_35, %c0_i32_36] : memref<8x32xf32, #tpu.memory_space<vmem>> -> memref<1x32xf32, #tpu.memory_space<vmem>>
    %87 = tpu.memref_slice %arg6[%c5_i32_33] : memref<8x!tpu.dma_semaphore, #tpu.memory_space<semaphore_mem>> -> memref<1x!tpu.dma_semaphore, #tpu.memory_space<semaphore_mem>>
    %88 = tpu.memref_squeeze %87 : memref<1x!tpu.dma_semaphore, #tpu.memory_space<semaphore_mem>> -> memref<!tpu.dma_semaphore, #tpu.memory_space<semaphore_mem>>
    tpu.enqueue_dma source(%85 : memref<1x32xf32, #tpu.memory_space<any>>) target(%86 : memref<1x32xf32, #tpu.memory_space<vmem>>) target_semaphore(%88 : memref<!tpu.dma_semaphore, #tpu.memory_space<semaphore_mem>>)
    %c6_i32 = arith.constant 6 : i32
    %89 = arith.addi %4, %c6_i32 : i32
    %90 = arith.index_cast %89 : i32 to index
    %91 = memref.load %arg2[%90] : memref<16xi32, #tpu.memory_space<smem>>
    %92 = arith.cmpi slt, %91, %0 : i32
    %93 = arith.cmpi sge, %91, %3 : i32
    %94 = arith.ori %92, %93 : i1
    %95 = arith.subi %91, %0 : i32
    %c32_i32_37 = arith.constant 32 : i32
    %96 = arith.select %94, %c32_i32_37, %95 : i32
    %c33_i32_38 = arith.constant 33 : i32
    %97 = arith.muli %arg1, %c33_i32_38 : i32
    %98 = arith.addi %97, %96 : i32
    %c6_i32_39 = arith.constant 6 : i32
    %c0_i32_40 = arith.constant 0 : i32
    %99 = tpu.memref_slice %arg3[%98, %c0_i32_40] : memref<66x32xf32, #tpu.memory_space<any>> -> memref<1x32xf32, #tpu.memory_space<any>>
    %c6_i32_41 = arith.constant 6 : i32
    %c0_i32_42 = arith.constant 0 : i32
    %100 = tpu.memref_slice %arg5[%c6_i32_41, %c0_i32_42] : memref<8x32xf32, #tpu.memory_space<vmem>> -> memref<1x32xf32, #tpu.memory_space<vmem>>
    %101 = tpu.memref_slice %arg6[%c6_i32_39] : memref<8x!tpu.dma_semaphore, #tpu.memory_space<semaphore_mem>> -> memref<1x!tpu.dma_semaphore, #tpu.memory_space<semaphore_mem>>
    %102 = tpu.memref_squeeze %101 : memref<1x!tpu.dma_semaphore, #tpu.memory_space<semaphore_mem>> -> memref<!tpu.dma_semaphore, #tpu.memory_space<semaphore_mem>>
    tpu.enqueue_dma source(%99 : memref<1x32xf32, #tpu.memory_space<any>>) target(%100 : memref<1x32xf32, #tpu.memory_space<vmem>>) target_semaphore(%102 : memref<!tpu.dma_semaphore, #tpu.memory_space<semaphore_mem>>)
    %c7_i32 = arith.constant 7 : i32
    %103 = arith.addi %4, %c7_i32 : i32
    %104 = arith.index_cast %103 : i32 to index
    %105 = memref.load %arg2[%104] : memref<16xi32, #tpu.memory_space<smem>>
    %106 = arith.cmpi slt, %105, %0 : i32
    %107 = arith.cmpi sge, %105, %3 : i32
    %108 = arith.ori %106, %107 : i1
    %109 = arith.subi %105, %0 : i32
    %c32_i32_43 = arith.constant 32 : i32
    %110 = arith.select %108, %c32_i32_43, %109 : i32
    %c33_i32_44 = arith.constant 33 : i32
    %111 = arith.muli %arg1, %c33_i32_44 : i32
    %112 = arith.addi %111, %110 : i32
    %c7_i32_45 = arith.constant 7 : i32
    %c0_i32_46 = arith.constant 0 : i32
    %113 = tpu.memref_slice %arg3[%112, %c0_i32_46] : memref<66x32xf32, #tpu.memory_space<any>> -> memref<1x32xf32, #tpu.memory_space<any>>
    %c7_i32_47 = arith.constant 7 : i32
    %c0_i32_48 = arith.constant 0 : i32
    %114 = tpu.memref_slice %arg5[%c7_i32_47, %c0_i32_48] : memref<8x32xf32, #tpu.memory_space<vmem>> -> memref<1x32xf32, #tpu.memory_space<vmem>>
    %115 = tpu.memref_slice %arg6[%c7_i32_45] : memref<8x!tpu.dma_semaphore, #tpu.memory_space<semaphore_mem>> -> memref<1x!tpu.dma_semaphore, #tpu.memory_space<semaphore_mem>>
    %116 = tpu.memref_squeeze %115 : memref<1x!tpu.dma_semaphore, #tpu.memory_space<semaphore_mem>> -> memref<!tpu.dma_semaphore, #tpu.memory_space<semaphore_mem>>
    tpu.enqueue_dma source(%113 : memref<1x32xf32, #tpu.memory_space<any>>) target(%114 : memref<1x32xf32, #tpu.memory_space<vmem>>) target_semaphore(%116 : memref<!tpu.dma_semaphore, #tpu.memory_space<semaphore_mem>>)
    %c0_i32_49 = arith.constant 0 : i32
    %c0_i32_50 = arith.constant 0 : i32
    %c0_i32_51 = arith.constant 0 : i32
    %117 = tpu.memref_slice %arg3[%c0_i32_50, %c0_i32_51] : memref<66x32xf32, #tpu.memory_space<any>> -> memref<1x32xf32, #tpu.memory_space<any>>
    %c0_i32_52 = arith.constant 0 : i32
    %c0_i32_53 = arith.constant 0 : i32
    %118 = tpu.memref_slice %arg5[%c0_i32_52, %c0_i32_53] : memref<8x32xf32, #tpu.memory_space<vmem>> -> memref<1x32xf32, #tpu.memory_space<vmem>>
    %119 = tpu.memref_slice %arg6[%c0_i32_49] : memref<8x!tpu.dma_semaphore, #tpu.memory_space<semaphore_mem>> -> memref<1x!tpu.dma_semaphore, #tpu.memory_space<semaphore_mem>>
    %120 = tpu.memref_squeeze %119 : memref<1x!tpu.dma_semaphore, #tpu.memory_space<semaphore_mem>> -> memref<!tpu.dma_semaphore, #tpu.memory_space<semaphore_mem>>
    tpu.wait_dma2 semaphore(%120 : memref<!tpu.dma_semaphore, #tpu.memory_space<semaphore_mem>>) src(%117 : memref<1x32xf32, #tpu.memory_space<any>>) dst(%118 : memref<1x32xf32, #tpu.memory_space<vmem>>)
    %c1_i32_54 = arith.constant 1 : i32
    %c0_i32_55 = arith.constant 0 : i32
    %c0_i32_56 = arith.constant 0 : i32
    %121 = tpu.memref_slice %arg3[%c0_i32_55, %c0_i32_56] : memref<66x32xf32, #tpu.memory_space<any>> -> memref<1x32xf32, #tpu.memory_space<any>>
    %c1_i32_57 = arith.constant 1 : i32
    %c0_i32_58 = arith.constant 0 : i32
    %122 = tpu.memref_slice %arg5[%c1_i32_57, %c0_i32_58] : memref<8x32xf32, #tpu.memory_space<vmem>> -> memref<1x32xf32, #tpu.memory_space<vmem>>
    %123 = tpu.memref_slice %arg6[%c1_i32_54] : memref<8x!tpu.dma_semaphore, #tpu.memory_space<semaphore_mem>> -> memref<1x!tpu.dma_semaphore, #tpu.memory_space<semaphore_mem>>
    %124 = tpu.memref_squeeze %123 : memref<1x!tpu.dma_semaphore, #tpu.memory_space<semaphore_mem>> -> memref<!tpu.dma_semaphore, #tpu.memory_space<semaphore_mem>>
    tpu.wait_dma2 semaphore(%124 : memref<!tpu.dma_semaphore, #tpu.memory_space<semaphore_mem>>) src(%121 : memref<1x32xf32, #tpu.memory_space<any>>) dst(%122 : memref<1x32xf32, #tpu.memory_space<vmem>>)
    %c2_i32_59 = arith.constant 2 : i32
    %c0_i32_60 = arith.constant 0 : i32
    %c0_i32_61 = arith.constant 0 : i32
    %125 = tpu.memref_slice %arg3[%c0_i32_60, %c0_i32_61] : memref<66x32xf32, #tpu.memory_space<any>> -> memref<1x32xf32, #tpu.memory_space<any>>
    %c2_i32_62 = arith.constant 2 : i32
    %c0_i32_63 = arith.constant 0 : i32
    %126 = tpu.memref_slice %arg5[%c2_i32_62, %c0_i32_63] : memref<8x32xf32, #tpu.memory_space<vmem>> -> memref<1x32xf32, #tpu.memory_space<vmem>>
    %127 = tpu.memref_slice %arg6[%c2_i32_59] : memref<8x!tpu.dma_semaphore, #tpu.memory_space<semaphore_mem>> -> memref<1x!tpu.dma_semaphore, #tpu.memory_space<semaphore_mem>>
    %128 = tpu.memref_squeeze %127 : memref<1x!tpu.dma_semaphore, #tpu.memory_space<semaphore_mem>> -> memref<!tpu.dma_semaphore, #tpu.memory_space<semaphore_mem>>
    tpu.wait_dma2 semaphore(%128 : memref<!tpu.dma_semaphore, #tpu.memory_space<semaphore_mem>>) src(%125 : memref<1x32xf32, #tpu.memory_space<any>>) dst(%126 : memref<1x32xf32, #tpu.memory_space<vmem>>)
    %c3_i32_64 = arith.constant 3 : i32
    %c0_i32_65 = arith.constant 0 : i32
    %c0_i32_66 = arith.constant 0 : i32
    %129 = tpu.memref_slice %arg3[%c0_i32_65, %c0_i32_66] : memref<66x32xf32, #tpu.memory_space<any>> -> memref<1x32xf32, #tpu.memory_space<any>>
    %c3_i32_67 = arith.constant 3 : i32
    %c0_i32_68 = arith.constant 0 : i32
    %130 = tpu.memref_slice %arg5[%c3_i32_67, %c0_i32_68] : memref<8x32xf32, #tpu.memory_space<vmem>> -> memref<1x32xf32, #tpu.memory_space<vmem>>
    %131 = tpu.memref_slice %arg6[%c3_i32_64] : memref<8x!tpu.dma_semaphore, #tpu.memory_space<semaphore_mem>> -> memref<1x!tpu.dma_semaphore, #tpu.memory_space<semaphore_mem>>
    %132 = tpu.memref_squeeze %131 : memref<1x!tpu.dma_semaphore, #tpu.memory_space<semaphore_mem>> -> memref<!tpu.dma_semaphore, #tpu.memory_space<semaphore_mem>>
    tpu.wait_dma2 semaphore(%132 : memref<!tpu.dma_semaphore, #tpu.memory_space<semaphore_mem>>) src(%129 : memref<1x32xf32, #tpu.memory_space<any>>) dst(%130 : memref<1x32xf32, #tpu.memory_space<vmem>>)
    %c4_i32_69 = arith.constant 4 : i32
    %c0_i32_70 = arith.constant 0 : i32
    %c0_i32_71 = arith.constant 0 : i32
    %133 = tpu.memref_slice %arg3[%c0_i32_70, %c0_i32_71] : memref<66x32xf32, #tpu.memory_space<any>> -> memref<1x32xf32, #tpu.memory_space<any>>
    %c4_i32_72 = arith.constant 4 : i32
    %c0_i32_73 = arith.constant 0 : i32
    %134 = tpu.memref_slice %arg5[%c4_i32_72, %c0_i32_73] : memref<8x32xf32, #tpu.memory_space<vmem>> -> memref<1x32xf32, #tpu.memory_space<vmem>>
    %135 = tpu.memref_slice %arg6[%c4_i32_69] : memref<8x!tpu.dma_semaphore, #tpu.memory_space<semaphore_mem>> -> memref<1x!tpu.dma_semaphore, #tpu.memory_space<semaphore_mem>>
    %136 = tpu.memref_squeeze %135 : memref<1x!tpu.dma_semaphore, #tpu.memory_space<semaphore_mem>> -> memref<!tpu.dma_semaphore, #tpu.memory_space<semaphore_mem>>
    tpu.wait_dma2 semaphore(%136 : memref<!tpu.dma_semaphore, #tpu.memory_space<semaphore_mem>>) src(%133 : memref<1x32xf32, #tpu.memory_space<any>>) dst(%134 : memref<1x32xf32, #tpu.memory_space<vmem>>)
    %c5_i32_74 = arith.constant 5 : i32
    %c0_i32_75 = arith.constant 0 : i32
    %c0_i32_76 = arith.constant 0 : i32
    %137 = tpu.memref_slice %arg3[%c0_i32_75, %c0_i32_76] : memref<66x32xf32, #tpu.memory_space<any>> -> memref<1x32xf32, #tpu.memory_space<any>>
    %c5_i32_77 = arith.constant 5 : i32
    %c0_i32_78 = arith.constant 0 : i32
    %138 = tpu.memref_slice %arg5[%c5_i32_77, %c0_i32_78] : memref<8x32xf32, #tpu.memory_space<vmem>> -> memref<1x32xf32, #tpu.memory_space<vmem>>
    %139 = tpu.memref_slice %arg6[%c5_i32_74] : memref<8x!tpu.dma_semaphore, #tpu.memory_space<semaphore_mem>> -> memref<1x!tpu.dma_semaphore, #tpu.memory_space<semaphore_mem>>
    %140 = tpu.memref_squeeze %139 : memref<1x!tpu.dma_semaphore, #tpu.memory_space<semaphore_mem>> -> memref<!tpu.dma_semaphore, #tpu.memory_space<semaphore_mem>>
    tpu.wait_dma2 semaphore(%140 : memref<!tpu.dma_semaphore, #tpu.memory_space<semaphore_mem>>) src(%137 : memref<1x32xf32, #tpu.memory_space<any>>) dst(%138 : memref<1x32xf32, #tpu.memory_space<vmem>>)
    %c6_i32_79 = arith.constant 6 : i32
    %c0_i32_80 = arith.constant 0 : i32
    %c0_i32_81 = arith.constant 0 : i32
    %141 = tpu.memref_slice %arg3[%c0_i32_80, %c0_i32_81] : memref<66x32xf32, #tpu.memory_space<any>> -> memref<1x32xf32, #tpu.memory_space<any>>
    %c6_i32_82 = arith.constant 6 : i32
    %c0_i32_83 = arith.constant 0 : i32
    %142 = tpu.memref_slice %arg5[%c6_i32_82, %c0_i32_83] : memref<8x32xf32, #tpu.memory_space<vmem>> -> memref<1x32xf32, #tpu.memory_space<vmem>>
    %143 = tpu.memref_slice %arg6[%c6_i32_79] : memref<8x!tpu.dma_semaphore, #tpu.memory_space<semaphore_mem>> -> memref<1x!tpu.dma_semaphore, #tpu.memory_space<semaphore_mem>>
    %144 = tpu.memref_squeeze %143 : memref<1x!tpu.dma_semaphore, #tpu.memory_space<semaphore_mem>> -> memref<!tpu.dma_semaphore, #tpu.memory_space<semaphore_mem>>
    tpu.wait_dma2 semaphore(%144 : memref<!tpu.dma_semaphore, #tpu.memory_space<semaphore_mem>>) src(%141 : memref<1x32xf32, #tpu.memory_space<any>>) dst(%142 : memref<1x32xf32, #tpu.memory_space<vmem>>)
    %c7_i32_84 = arith.constant 7 : i32
    %c0_i32_85 = arith.constant 0 : i32
    %c0_i32_86 = arith.constant 0 : i32
    %145 = tpu.memref_slice %arg3[%c0_i32_85, %c0_i32_86] : memref<66x32xf32, #tpu.memory_space<any>> -> memref<1x32xf32, #tpu.memory_space<any>>
    %c7_i32_87 = arith.constant 7 : i32
    %c0_i32_88 = arith.constant 0 : i32
    %146 = tpu.memref_slice %arg5[%c7_i32_87, %c0_i32_88] : memref<8x32xf32, #tpu.memory_space<vmem>> -> memref<1x32xf32, #tpu.memory_space<vmem>>
    %147 = tpu.memref_slice %arg6[%c7_i32_84] : memref<8x!tpu.dma_semaphore, #tpu.memory_space<semaphore_mem>> -> memref<1x!tpu.dma_semaphore, #tpu.memory_space<semaphore_mem>>
    %148 = tpu.memref_squeeze %147 : memref<1x!tpu.dma_semaphore, #tpu.memory_space<semaphore_mem>> -> memref<!tpu.dma_semaphore, #tpu.memory_space<semaphore_mem>>
    tpu.wait_dma2 semaphore(%148 : memref<!tpu.dma_semaphore, #tpu.memory_space<semaphore_mem>>) src(%145 : memref<1x32xf32, #tpu.memory_space<any>>) dst(%146 : memref<1x32xf32, #tpu.memory_space<vmem>>)
    %c0_i32_89 = arith.constant 0 : i32
    %149 = arith.cmpi eq, %arg1, %c0_i32_89 : i32
    %150 = arith.extui %149 : i1 to i32
    %c0_i32_90 = arith.constant 0 : i32
    %151 = arith.cmpi ne, %150, %c0_i32_90 : i32
    scf.if %151 {
      %cst = arith.constant 0.000000e+00 : f32
      %156 = vector.broadcast %cst : f32 to vector<8x32xf32>
      %c0_96 = arith.constant 0 : index
      %c0_97 = arith.constant 0 : index
      %157 = vector.load %arg4[%c0_96, %c0_97] : memref<8x32xf32, #tpu.memory_space<vmem>>, vector<8x32xf32>
      tpu.vector_store %arg4[%c0_96, %c0_97], %156 {strides = array<i32>} : memref<8x32xf32, #tpu.memory_space<vmem>>, vector<8x32xf32>,
    } else {
    }
    %c0 = arith.constant 0 : index
    %c0_91 = arith.constant 0 : index
    %152 = vector.load %arg4[%c0, %c0_91] : memref<8x32xf32, #tpu.memory_space<vmem>>, vector<8x32xf32>
    %c0_92 = arith.constant 0 : index
    %c0_93 = arith.constant 0 : index
    %153 = vector.load %arg5[%c0_92, %c0_93] : memref<8x32xf32, #tpu.memory_space<vmem>>, vector<8x32xf32>
    %154 = arith.addf %152, %153 : vector<8x32xf32>
    %c0_94 = arith.constant 0 : index
    %c0_95 = arith.constant 0 : index
    %155 = vector.load %arg4[%c0_94, %c0_95] : memref<8x32xf32, #tpu.memory_space<vmem>>, vector<8x32xf32>
    tpu.vector_store %arg4[%c0_94, %c0_95], %154 {strides = array<i32>} : memref<8x32xf32, #tpu.memory_space<vmem>>, vector<8x32xf32>,
    return
  }
  func.func @transform_1(%arg0: i32, %arg1: i32, %arg2: memref<16xi32, #tpu.memory_space<smem>>) -> (i32, i32) {
    %c0_i32 = arith.constant 0 : i32
    %c0_i32_0 = arith.constant 0 : i32
    return %arg0, %c0_i32 : i32, i32
  }
}

</mosaic_0001>

<llo_original>
// kernel: tpu_custom_call.1
$region0: #{tpu_custom_call.1}
  #allocation0 [shape = 'u32[]', space=smem, size = 0x4, offset = 0x4, fixed_abs, tag = 'smem constant byte address 0x4 - core index']
  #allocation1 [shape = 'u32[144,128]{1,0:T(1,128)}', space=vmem, size = 0x12000, scoped, tag = 'internal scratch']
  #allocation2 [shape = 'f32[8,32]{1,0:T(8,128)}', space=vmem, size = 0x1000, scoped, tag = 'scratch operand']
  #allocation3 [shape = 's32[8]{0}', space=sflag, size = 0x20, scoped, tag = 'scratch operand']
  #allocation4 [shape = 's32[1]{0}', space=sflag, size = 0x4, scoped, tag = 'scoped memory for tpu_custom_call.1']
  #allocation5 [shape = 'u8[512]{0}', space=smem, size = 0x200, scoped, tag = 'prefetched SMEM operand 0']
  #allocation8 [shape = 's32[]', space=sflag, size = 0x4, offset = 0, fixed_abs, tag = 'sflag constant byte address 0x0 - dummy sync flag']
  #allocation9 [shape = 's32[]', space=sflag, size = 0x4, offset = 0, fixed_abs, tag = 'sflag constant byte address 0x0 - dummy sync flag']
  #allocation10 [shape = 's32[]', space=sflag, size = 0x4, offset = 0, fixed_abs, tag = 'sflag constant byte address 0x0 - dummy sync flag']
  #allocation11 [shape = 's32[]', space=sflag, size = 0x4, offset = 0, fixed_abs, tag = 'sflag constant byte address 0x0 - dummy sync flag']
  #allocation12 [shape = 's32[]', space=sflag, size = 0x4, offset = 0, fixed_abs, tag = 'sflag constant byte address 0x0 - dummy sync flag']
  #allocation13 [shape = 's32[]', space=sflag, size = 0x4, offset = 0, fixed_abs, tag = 'sflag constant byte address 0x0 - dummy sync flag']
  #allocation14 [shape = 's32[]', space=sflag, size = 0x4, offset = 0, fixed_abs, tag = 'sflag constant byte address 0x0 - dummy sync flag']
  #allocation15 [shape = 's32[]', space=sflag, size = 0x4, offset = 0, fixed_abs, tag = 'sflag constant byte address 0x0 - dummy sync flag']
  %s0 = inlined_call_operand.vmem [shape: s32[16], index: 0, kind: input, shape index: {}]
  %s1 = inlined_call_operand.vmem [shape: f32[66,32], index: 1, kind: input, shape index: {}]
  %s2 = inlined_call_operand.hbm [shape: f32[16,32], index: 2, kind: output, shape index: {}]
  %s3 = sld [smem:[#allocation0]]
  $region269: #{tpu_custom_call.1} parent=0
    _
  %s5 = ssub.s32 1, %s3
  %s6 = scalar_select 0, %s5, %s3
  %s7 = sshll.u32 %s0, 4
  %s8 = int_to_ptr.vmem [resolvable:$true] %s7
  %10 = dma.vmem_to_smem %s8, 16, [#allocation5], [#allocation4]
  %11 = dma.done [#allocation4], 16
  %12 = sfence
  $region1: #{tpu_custom_call.1} parent=0
    #allocation6 [shape = 'u8[8192]{0}', space=vmem, size = 0x2000, scoped, tag = 'output window, operand 0']
    #allocation7 [shape = 's32[2]{0}', space=sflag, size = 0x8, scoped, tag = 'scoped memory for tpu_custom_call.1']
    %13 = vsyncpa [#allocation7], 0
    %s14 = scalar_lea.sflag [#allocation7], 1
    %15 = vsyncpa %s14, 0
    loop: start=0, step=1, limit=5
    $region2: #{tpu_custom_call.1} parent=1 // loop_pre_header
      _
    $region3: #{tpu_custom_call.1} parent=1 // loop_header
      %s17 = sphi 0, %s21
      %p18 = scmp.ge.s32.totalorder %s17, 5
      %s23 = sphi 0, %s33
      %s24 = sphi 0, %s29
      %s25 = sphi 0, %s23
      %s26 = sphi 0, %s24
      %s36 = sphi 0, %s38
      %s39 = sphi 0, %s36
      %s49 = sphi 0, %s39
    $region4: #{tpu_custom_call.1} parent=1 // loop_header_branch
      %20 = sbr.rel (%p18) target = $region8
    $region5: #{tpu_custom_call.1} parent=1 // loop_body
      %s22 = ssub.s32 %s17, 1
      %s27 = sadd.s32 1, %s24
      %p28 = scmp.ge.s32.totalorder %s27, 2
      %s29 = scalar_select %p28, 0, %s27
      %s30 = sadd.s32 1, %s23
      %s31 = scalar_select %p28, %s30, %s23
      %p32 = scmp.ge.s32.totalorder %s31, 2
      %s33 = scalar_select %p32, 0, %s31
      %s34 = ssub.s32 %s23, %s33
      %p35 = scmp.eq.s32.totalorder %s34, 0
      %s37 = sadd.s32 %s36, 1
      %s38 = scalar_select %p35, %s36, %s37
      %p40 = pneg %p35
      %p41 = scmp.eq.s32.totalorder %s17, 3
      %p42 = por %p40, %p41
      %p43 = scmp.ne.s32.totalorder %s36, %s39
      %p44 = scmp.eq.s32.totalorder %s17, 0
      %p45 = por %p43, %p44
      %p46 = scmp.ne.s32.totalorder %s36, %s39
      %p47 = scmp.eq.s32.totalorder %s22, 3
      %p48 = por %p46, %p47
      %p50 = scmp.ne.s32.totalorder %s39, %s49
      %p51 = scmp.eq.s32.totalorder %s22, 0
      %p52 = por %p50, %p51
      %p53 = scmp.lt.s32.totalorder %s17, 4
      // Predicated region
      $region9: #{tpu_custom_call.1} parent=5 // pred_check
        %p54 = pneg %p53
      $region10: #{tpu_custom_call.1} parent=5 // pred_check_branch
        %56 = sbr.rel (%p54) target = $region12
      $region11: #{tpu_custom_call.1} parent=5 // pred_region
        %p57 = pneg %p45
        %p58 = pneg %p42
        %s59 = sand.u32 %s36, 1
        %s60 = scalar_lea.sflag [#allocation7], %s59
        %s61 = sand.u32 %s36, 1
        %s62 = smul.addr %s61, 8
        %s63 = scalar_lea.vmem [#allocation6], %s62
        %s64 = smul.u32 %s24, 32
        %s65 = sadd.s32 %s24, 1
        %s66 = smul.u32 %s65, 32
        %p67 = scmp.lt.s32.totalorder %s66, 64
        %s68 = scalar_select %p67, %s66, 64
        %s69 = smul.u32 %s23, 8
        %s70 = sld [smem:[#allocation5 + %s69]]
        %p71 = scmp.lt.s32.totalorder %s70, %s64
        %p72 = scmp.ge.s32.totalorder %s70, %s68
        %p73 = por %p71, %p72
        %s74 = ssub.s32 %s70, %s64
        %s75 = scalar_select %p73, 32, %s74
        %s76 = smul.u32 %s24, 33
        %s77 = sadd.s32 %s76, %s75
        %s78 = scalar_lea.vmem %s1, %s77
        %p80 = scmp.lt.u32.totalorder 1, 8
        %p81 = pneg %p80
        // Predicated region
        $region13: #{tpu_custom_call.1} parent=11 // pred_check
          _
        $region14: #{tpu_custom_call.1} parent=11 // pred_check_branch
          %83 = sbr.rel (%p80) target = $region16
        $region15: #{tpu_custom_call.1} parent=11 // pred_region
          %s98 = sand.u32 1, 7
          %p99 = scmp.eq.s32.totalorder %s98, 0
          %p100 = pneg %p99
          // Predicated region
          $region28: #{tpu_custom_call.1} parent=15 // pred_check
            _
          $region29: #{tpu_custom_call.1} parent=15 // pred_check_branch
            %102 = sbr.rel (%p99) target = $region31
          $region30: #{tpu_custom_call.1} parent=15 // pred_region
            %s103 = sand.u32 1, 7
            %s104 = ssub.s32 1, %s103
            %s105 = scalar_lea.vmem %s78, %s104
            %s106 = ssub.s32 1, %s103
            %s107 = scalar_lea.vmem [#allocation2], %s106
            %s108 = sshllo.u32 0, %s103
            loop: start=0, step=1, limit=1
            $region32: #{tpu_custom_call.1} parent=30 // loop_pre_header
              _
            $region33: #{tpu_custom_call.1} parent=30 // loop_header
              %s110 = sphi 0, %s114
              %p111 = scmp.ge.s32.totalorder %s110, 1
              %s115 = sphi %s105, %s105
              %s116 = sphi %s107, %s107
            $region34: #{tpu_custom_call.1} parent=30 // loop_header_branch
              %113 = sbr.rel (%p111) target = $region38
            $region35: #{tpu_custom_call.1} parent=30 // loop_body
              %v117 = vld [vmem:[%s115] sm:%s108]
              %118 = vst [vmem:[%s116] sm:%s108] %v117
            $region36: #{tpu_custom_call.1} parent=30 // loop_footer
              %s114 = sadd.s32 1, %s110
            $region37: #{tpu_custom_call.1} parent=30 // loop_footer_branch
              %109 = sbr.rel target = $region33
            $region38: #{tpu_custom_call.1} parent=30 // loop_exit
              _
          $region31: #{tpu_custom_call.1} parent=15 // pred_fallthru
            _
        $region16: #{tpu_custom_call.1} parent=11 // pred_fallthru
          _
        // Predicated region
        $region17: #{tpu_custom_call.1} parent=11 // pred_check
          %p84 = pneg %p80
        $region18: #{tpu_custom_call.1} parent=11 // pred_check_branch
          %86 = sbr.rel (%p84) target = $region20
        $region19: #{tpu_custom_call.1} parent=11 // pred_region
          %s87 = sshllo.u32 0, 1
          loop: start=0, step=1, limit=1
          $region21: #{tpu_custom_call.1} parent=19 // loop_pre_header
            _
          $region22: #{tpu_custom_call.1} parent=19 // loop_header
            %s89 = sphi 0, %s93
            %p90 = scmp.ge.s32.totalorder %s89, 1
            %s94 = sphi %s78, %s78
            %s95 = sphi [#allocation2], [#allocation2]
          $region23: #{tpu_custom_call.1} parent=19 // loop_header_branch
            %92 = sbr.rel (%p90) target = $region27
          $region24: #{tpu_custom_call.1} parent=19 // loop_body
            %v96 = vld [vmem:[%s94] sm:%s87]
            %97 = vst [vmem:[%s95] sm:%s87] %v96
          $region25: #{tpu_custom_call.1} parent=19 // loop_footer
            %s93 = sadd.s32 1, %s89
          $region26: #{tpu_custom_call.1} parent=19 // loop_footer_branch
            %88 = sbr.rel target = $region22
          $region27: #{tpu_custom_call.1} parent=19 // loop_exit
            _
        $region20: #{tpu_custom_call.1} parent=11 // pred_fallthru
          _
        // Predicated region
        $region39: #{tpu_custom_call.1} parent=11 // pred_check
          _
        $region40: #{tpu_custom_call.1} parent=11 // pred_check_branch
          %121 = sbr.rel (0) target = $region42
        $region41: #{tpu_custom_call.1} parent=11 // pred_region
          %122 = vsyncadd [#allocation3], 16
        $region42: #{tpu_custom_call.1} parent=11 // pred_fallthru
          _
        %s123 = sadd.s32 %s69, 1
        %s124 = sld [smem:[#allocation5 + %s123]]
        %p125 = scmp.lt.s32.totalorder %s124, %s64
        %p126 = scmp.ge.s32.totalorder %s124, %s68
        %p127 = por %p125, %p126
        %s128 = ssub.s32 %s124, %s64
        %s129 = scalar_select %p127, 32, %s128
        %s130 = sadd.s32 %s76, %s129
        %s131 = scalar_lea.vmem %s1, %s130
        %s132 = scalar_lea.vmem [#allocation2], 1
        %s133 = scalar_lea.sflag [#allocation3], 1
        %p135 = scmp.lt.u32.totalorder 1, 8
        %p136 = pneg %p135
        // Predicated region
        $region43: #{tpu_custom_call.1} parent=11 // pred_check
          _
        $region44: #{tpu_custom_call.1} parent=11 // pred_check_branch
          %138 = sbr.rel (%p135) target = $region46
        $region45: #{tpu_custom_call.1} parent=11 // pred_region
          %s153 = sand.u32 1, 7
          %p154 = scmp.eq.s32.totalorder %s153, 0
          %p155 = pneg %p154
          // Predicated region
          $region58: #{tpu_custom_call.1} parent=45 // pred_check
            _
          $region59: #{tpu_custom_call.1} parent=45 // pred_check_branch
            %157 = sbr.rel (%p154) target = $region61
          $region60: #{tpu_custom_call.1} parent=45 // pred_region
            %s158 = sand.u32 1, 7
            %s159 = ssub.s32 1, %s158
            %s160 = scalar_lea.vmem %s131, %s159
            %s161 = ssub.s32 1, %s158
            %s162 = scalar_lea.vmem %s132, %s161 [#allocation2]
            %s163 = sshllo.u32 0, %s158
            loop: start=0, step=1, limit=1
            $region62: #{tpu_custom_call.1} parent=60 // loop_pre_header
              _
            $region63: #{tpu_custom_call.1} parent=60 // loop_header
              %s165 = sphi 0, %s169
              %p166 = scmp.ge.s32.totalorder %s165, 1
              %s170 = sphi %s160, %s160
              %s171 = sphi %s162, %s162
            $region64: #{tpu_custom_call.1} parent=60 // loop_header_branch
              %168 = sbr.rel (%p166) target = $region68
            $region65: #{tpu_custom_call.1} parent=60 // loop_body
              %v172 = vld [vmem:[%s170] sm:%s163]
              %173 = vst [vmem:[%s171] sm:%s163] %v172
            $region66: #{tpu_custom_call.1} parent=60 // loop_footer
              %s169 = sadd.s32 1, %s165
            $region67: #{tpu_custom_call.1} parent=60 // loop_footer_branch
              %164 = sbr.rel target = $region63
            $region68: #{tpu_custom_call.1} parent=60 // loop_exit
              _
          $region61: #{tpu_custom_call.1} parent=45 // pred_fallthru
            _
        $region46: #{tpu_custom_call.1} parent=11 // pred_fallthru
          _
        // Predicated region
        $region47: #{tpu_custom_call.1} parent=11 // pred_check
          %p139 = pneg %p135
        $region48: #{tpu_custom_call.1} parent=11 // pred_check_branch
          %141 = sbr.rel (%p139) target = $region50
        $region49: #{tpu_custom_call.1} parent=11 // pred_region
          %s142 = sshllo.u32 0, 1
          loop: start=0, step=1, limit=1
          $region51: #{tpu_custom_call.1} parent=49 // loop_pre_header
            _
          $region52: #{tpu_custom_call.1} parent=49 // loop_header
            %s144 = sphi 0, %s148
            %p145 = scmp.ge.s32.totalorder %s144, 1
            %s149 = sphi %s131, %s131
            %s150 = sphi %s132, %s132
          $region53: #{tpu_custom_call.1} parent=49 // loop_header_branch
            %147 = sbr.rel (%p145) target = $region57
          $region54: #{tpu_custom_call.1} parent=49 // loop_body
            %v151 = vld [vmem:[%s149] sm:%s142]
            %152 = vst [vmem:[%s150] sm:%s142] %v151
          $region55: #{tpu_custom_call.1} parent=49 // loop_footer
            %s148 = sadd.s32 1, %s144
          $region56: #{tpu_custom_call.1} parent=49 // loop_footer_branch
            %143 = sbr.rel target = $region52
          $region57: #{tpu_custom_call.1} parent=49 // loop_exit
            _
        $region50: #{tpu_custom_call.1} parent=11 // pred_fallthru
          _
        // Predicated region
        $region69: #{tpu_custom_call.1} parent=11 // pred_check
          _
        $region70: #{tpu_custom_call.1} parent=11 // pred_check_branch
          %176 = sbr.rel (0) target = $region72
        $region71: #{tpu_custom_call.1} parent=11 // pred_region
          %177 = vsyncadd %s133, 16
        $region72: #{tpu_custom_call.1} parent=11 // pred_fallthru
          _
        %s178 = sadd.s32 %s69, 2
        %s179 = sld [smem:[#allocation5 + %s178]]
        %p180 = scmp.lt.s32.totalorder %s179, %s64
        %p181 = scmp.ge.s32.totalorder %s179, %s68
        %p182 = por %p180, %p181
        %s183 = ssub.s32 %s179, %s64
        %s184 = scalar_select %p182, 32, %s183
        %s185 = sadd.s32 %s76, %s184
        %s186 = scalar_lea.vmem %s1, %s185
        %s187 = scalar_lea.vmem [#allocation2], 2
        %s188 = scalar_lea.sflag [#allocation3], 2
        %p190 = scmp.lt.u32.totalorder 1, 8
        %p191 = pneg %p190
        // Predicated region
        $region73: #{tpu_custom_call.1} parent=11 // pred_check
          _
        $region74: #{tpu_custom_call.1} parent=11 // pred_check_branch
          %193 = sbr.rel (%p190) target = $region76
        $region75: #{tpu_custom_call.1} parent=11 // pred_region
          %s208 = sand.u32 1, 7
          %p209 = scmp.eq.s32.totalorder %s208, 0
          %p210 = pneg %p209
          // Predicated region
          $region88: #{tpu_custom_call.1} parent=75 // pred_check
            _
          $region89: #{tpu_custom_call.1} parent=75 // pred_check_branch
            %212 = sbr.rel (%p209) target = $region91
          $region90: #{tpu_custom_call.1} parent=75 // pred_region
            %s213 = sand.u32 1, 7
            %s214 = ssub.s32 1, %s213
            %s215 = scalar_lea.vmem %s186, %s214
            %s216 = ssub.s32 1, %s213
            %s217 = scalar_lea.vmem %s187, %s216 [#allocation2]
            %s218 = sshllo.u32 0, %s213
            loop: start=0, step=1, limit=1
            $region92: #{tpu_custom_call.1} parent=90 // loop_pre_header
              _
            $region93: #{tpu_custom_call.1} parent=90 // loop_header
              %s220 = sphi 0, %s224
              %p221 = scmp.ge.s32.totalorder %s220, 1
              %s225 = sphi %s215, %s215
              %s226 = sphi %s217, %s217
            $region94: #{tpu_custom_call.1} parent=90 // loop_header_branch
              %223 = sbr.rel (%p221) target = $region98
            $region95: #{tpu_custom_call.1} parent=90 // loop_body
              %v227 = vld [vmem:[%s225] sm:%s218]
              %228 = vst [vmem:[%s226] sm:%s218] %v227
            $region96: #{tpu_custom_call.1} parent=90 // loop_footer
              %s224 = sadd.s32 1, %s220
            $region97: #{tpu_custom_call.1} parent=90 // loop_footer_branch
              %219 = sbr.rel target = $region93
            $region98: #{tpu_custom_call.1} parent=90 // loop_exit
              _
          $region91: #{tpu_custom_call.1} parent=75 // pred_fallthru
            _
        $region76: #{tpu_custom_call.1} parent=11 // pred_fallthru
          _
        // Predicated region
        $region77: #{tpu_custom_call.1} parent=11 // pred_check
          %p194 = pneg %p190
        $region78: #{tpu_custom_call.1} parent=11 // pred_check_branch
          %196 = sbr.rel (%p194) target = $region80
        $region79: #{tpu_custom_call.1} parent=11 // pred_region
          %s197 = sshllo.u32 0, 1
          loop: start=0, step=1, limit=1
          $region81: #{tpu_custom_call.1} parent=79 // loop_pre_header
            _
          $region82: #{tpu_custom_call.1} parent=79 // loop_header
            %s199 = sphi 0, %s203
            %p200 = scmp.ge.s32.totalorder %s199, 1
            %s204 = sphi %s186, %s186
            %s205 = sphi %s187, %s187
          $region83: #{tpu_custom_call.1} parent=79 // loop_header_branch
            %202 = sbr.rel (%p200) target = $region87
          $region84: #{tpu_custom_call.1} parent=79 // loop_body
            %v206 = vld [vmem:[%s204] sm:%s197]
            %207 = vst [vmem:[%s205] sm:%s197] %v206
          $region85: #{tpu_custom_call.1} parent=79 // loop_footer
            %s203 = sadd.s32 1, %s199
          $region86: #{tpu_custom_call.1} parent=79 // loop_footer_branch
            %198 = sbr.rel target = $region82
          $region87: #{tpu_custom_call.1} parent=79 // loop_exit
            _
        $region80: #{tpu_custom_call.1} parent=11 // pred_fallthru
          _
        // Predicated region
        $region99: #{tpu_custom_call.1} parent=11 // pred_check
          _
        $region100: #{tpu_custom_call.1} parent=11 // pred_check_branch
          %231 = sbr.rel (0) target = $region102
        $region101: #{tpu_custom_call.1} parent=11 // pred_region
          %232 = vsyncadd %s188, 16
        $region102: #{tpu_custom_call.1} parent=11 // pred_fallthru
          _
        %s233 = sadd.s32 %s69, 3
        %s234 = sld [smem:[#allocation5 + %s233]]
        %p235 = scmp.lt.s32.totalorder %s234, %s64
        %p236 = scmp.ge.s32.totalorder %s234, %s68
        %p237 = por %p235, %p236
        %s238 = ssub.s32 %s234, %s64
        %s239 = scalar_select %p237, 32, %s238
        %s240 = sadd.s32 %s76, %s239
        %s241 = scalar_lea.vmem %s1, %s240
        %s242 = scalar_lea.vmem [#allocation2], 3
        %s243 = scalar_lea.sflag [#allocation3], 3
        %p245 = scmp.lt.u32.totalorder 1, 8
        %p246 = pneg %p245
        // Predicated region
        $region103: #{tpu_custom_call.1} parent=11 // pred_check
          _
        $region104: #{tpu_custom_call.1} parent=11 // pred_check_branch
          %248 = sbr.rel (%p245) target = $region106
        $region105: #{tpu_custom_call.1} parent=11 // pred_region
          %s263 = sand.u32 1, 7
          %p264 = scmp.eq.s32.totalorder %s263, 0
          %p265 = pneg %p264
          // Predicated region
          $region118: #{tpu_custom_call.1} parent=105 // pred_check
            _
          $region119: #{tpu_custom_call.1} parent=105 // pred_check_branch
            %267 = sbr.rel (%p264) target = $region121
          $region120: #{tpu_custom_call.1} parent=105 // pred_region
            %s268 = sand.u32 1, 7
            %s269 = ssub.s32 1, %s268
            %s270 = scalar_lea.vmem %s241, %s269
            %s271 = ssub.s32 1, %s268
            %s272 = scalar_lea.vmem %s242, %s271 [#allocation2]
            %s273 = sshllo.u32 0, %s268
            loop: start=0, step=1, limit=1
            $region122: #{tpu_custom_call.1} parent=120 // loop_pre_header
              _
            $region123: #{tpu_custom_call.1} parent=120 // loop_header
              %s275 = sphi 0, %s279
              %p276 = scmp.ge.s32.totalorder %s275, 1
              %s280 = sphi %s270, %s270
              %s281 = sphi %s272, %s272
            $region124: #{tpu_custom_call.1} parent=120 // loop_header_branch
              %278 = sbr.rel (%p276) target = $region128
            $region125: #{tpu_custom_call.1} parent=120 // loop_body
              %v282 = vld [vmem:[%s280] sm:%s273]
              %283 = vst [vmem:[%s281] sm:%s273] %v282
            $region126: #{tpu_custom_call.1} parent=120 // loop_footer
              %s279 = sadd.s32 1, %s275
            $region127: #{tpu_custom_call.1} parent=120 // loop_footer_branch
              %274 = sbr.rel target = $region123
            $region128: #{tpu_custom_call.1} parent=120 // loop_exit
              _
          $region121: #{tpu_custom_call.1} parent=105 // pred_fallthru
            _
        $region106: #{tpu_custom_call.1} parent=11 // pred_fallthru
          _
        // Predicated region
        $region107: #{tpu_custom_call.1} parent=11 // pred_check
          %p249 = pneg %p245
        $region108: #{tpu_custom_call.1} parent=11 // pred_check_branch
          %251 = sbr.rel (%p249) target = $region110
        $region109: #{tpu_custom_call.1} parent=11 // pred_region
          %s252 = sshllo.u32 0, 1
          loop: start=0, step=1, limit=1
          $region111: #{tpu_custom_call.1} parent=109 // loop_pre_header
            _
          $region112: #{tpu_custom_call.1} parent=109 // loop_header
            %s254 = sphi 0, %s258
            %p255 = scmp.ge.s32.totalorder %s254, 1
            %s259 = sphi %s241, %s241
            %s260 = sphi %s242, %s242
          $region113: #{tpu_custom_call.1} parent=109 // loop_header_branch
            %257 = sbr.rel (%p255) target = $region117
          $region114: #{tpu_custom_call.1} parent=109 // loop_body
            %v261 = vld [vmem:[%s259] sm:%s252]
            %262 = vst [vmem:[%s260] sm:%s252] %v261
          $region115: #{tpu_custom_call.1} parent=109 // loop_footer
            %s258 = sadd.s32 1, %s254
          $region116: #{tpu_custom_call.1} parent=109 // loop_footer_branch
            %253 = sbr.rel target = $region112
          $region117: #{tpu_custom_call.1} parent=109 // loop_exit
            _
        $region110: #{tpu_custom_call.1} parent=11 // pred_fallthru
          _
        // Predicated region
        $region129: #{tpu_custom_call.1} parent=11 // pred_check
          _
        $region130: #{tpu_custom_call.1} parent=11 // pred_check_branch
          %286 = sbr.rel (0) target = $region132
        $region131: #{tpu_custom_call.1} parent=11 // pred_region
          %287 = vsyncadd %s243, 16
        $region132: #{tpu_custom_call.1} parent=11 // pred_fallthru
          _
        %s288 = sadd.s32 %s69, 4
        %s289 = sld [smem:[#allocation5 + %s288]]
        %p290 = scmp.lt.s32.totalorder %s289, %s64
        %p291 = scmp.ge.s32.totalorder %s289, %s68
        %p292 = por %p290, %p291
        %s293 = ssub.s32 %s289, %s64
        %s294 = scalar_select %p292, 32, %s293
        %s295 = sadd.s32 %s76, %s294
        %s296 = scalar_lea.vmem %s1, %s295
        %s297 = scalar_lea.vmem [#allocation2], 4
        %s298 = scalar_lea.sflag [#allocation3], 4
        %p300 = scmp.lt.u32.totalorder 1, 8
        %p301 = pneg %p300
        // Predicated region
        $region133: #{tpu_custom_call.1} parent=11 // pred_check
          _
        $region134: #{tpu_custom_call.1} parent=11 // pred_check_branch
          %303 = sbr.rel (%p300) target = $region136
        $region135: #{tpu_custom_call.1} parent=11 // pred_region
          %s318 = sand.u32 1, 7
          %p319 = scmp.eq.s32.totalorder %s318, 0
          %p320 = pneg %p319
          // Predicated region
          $region148: #{tpu_custom_call.1} parent=135 // pred_check
            _
          $region149: #{tpu_custom_call.1} parent=135 // pred_check_branch
            %322 = sbr.rel (%p319) target = $region151
          $region150: #{tpu_custom_call.1} parent=135 // pred_region
            %s323 = sand.u32 1, 7
            %s324 = ssub.s32 1, %s323
            %s325 = scalar_lea.vmem %s296, %s324
            %s326 = ssub.s32 1, %s323
            %s327 = scalar_lea.vmem %s297, %s326 [#allocation2]
            %s328 = sshllo.u32 0, %s323
            loop: start=0, step=1, limit=1
            $region152: #{tpu_custom_call.1} parent=150 // loop_pre_header
              _
            $region153: #{tpu_custom_call.1} parent=150 // loop_header
              %s330 = sphi 0, %s334
              %p331 = scmp.ge.s32.totalorder %s330, 1
              %s335 = sphi %s325, %s325
              %s336 = sphi %s327, %s327
            $region154: #{tpu_custom_call.1} parent=150 // loop_header_branch
              %333 = sbr.rel (%p331) target = $region158
            $region155: #{tpu_custom_call.1} parent=150 // loop_body
              %v337 = vld [vmem:[%s335] sm:%s328]
              %338 = vst [vmem:[%s336] sm:%s328] %v337
            $region156: #{tpu_custom_call.1} parent=150 // loop_footer
              %s334 = sadd.s32 1, %s330
            $region157: #{tpu_custom_call.1} parent=150 // loop_footer_branch
              %329 = sbr.rel target = $region153
            $region158: #{tpu_custom_call.1} parent=150 // loop_exit
              _
          $region151: #{tpu_custom_call.1} parent=135 // pred_fallthru
            _
        $region136: #{tpu_custom_call.1} parent=11 // pred_fallthru
          _
        // Predicated region
        $region137: #{tpu_custom_call.1} parent=11 // pred_check
          %p304 = pneg %p300
        $region138: #{tpu_custom_call.1} parent=11 // pred_check_branch
          %306 = sbr.rel (%p304) target = $region140
        $region139: #{tpu_custom_call.1} parent=11 // pred_region
          %s307 = sshllo.u32 0, 1
          loop: start=0, step=1, limit=1
          $region141: #{tpu_custom_call.1} parent=139 // loop_pre_header
            _
          $region142: #{tpu_custom_call.1} parent=139 // loop_header
            %s309 = sphi 0, %s313
            %p310 = scmp.ge.s32.totalorder %s309, 1
            %s314 = sphi %s296, %s296
            %s315 = sphi %s297, %s297
          $region143: #{tpu_custom_call.1} parent=139 // loop_header_branch
            %312 = sbr.rel (%p310) target = $region147
          $region144: #{tpu_custom_call.1} parent=139 // loop_body
            %v316 = vld [vmem:[%s314] sm:%s307]
            %317 = vst [vmem:[%s315] sm:%s307] %v316
          $region145: #{tpu_custom_call.1} parent=139 // loop_footer
            %s313 = sadd.s32 1, %s309
          $region146: #{tpu_custom_call.1} parent=139 // loop_footer_branch
            %308 = sbr.rel target = $region142
          $region147: #{tpu_custom_call.1} parent=139 // loop_exit
            _
        $region140: #{tpu_custom_call.1} parent=11 // pred_fallthru
          _
        // Predicated region
        $region159: #{tpu_custom_call.1} parent=11 // pred_check
          _
        $region160: #{tpu_custom_call.1} parent=11 // pred_check_branch
          %341 = sbr.rel (0) target = $region162
        $region161: #{tpu_custom_call.1} parent=11 // pred_region
          %342 = vsyncadd %s298, 16
        $region162: #{tpu_custom_call.1} parent=11 // pred_fallthru
          _
        %s343 = sadd.s32 %s69, 5
        %s344 = sld [smem:[#allocation5 + %s343]]
        %p345 = scmp.lt.s32.totalorder %s344, %s64
        %p346 = scmp.ge.s32.totalorder %s344, %s68
        %p347 = por %p345, %p346
        %s348 = ssub.s32 %s344, %s64
        %s349 = scalar_select %p347, 32, %s348
        %s350 = sadd.s32 %s76, %s349
        %s351 = scalar_lea.vmem %s1, %s350
        %s352 = scalar_lea.vmem [#allocation2], 5
        %s353 = scalar_lea.sflag [#allocation3], 5
        %p355 = scmp.lt.u32.totalorder 1, 8
        %p356 = pneg %p355
        // Predicated region
        $region163: #{tpu_custom_call.1} parent=11 // pred_check
          _
        $region164: #{tpu_custom_call.1} parent=11 // pred_check_branch
          %358 = sbr.rel (%p355) target = $region166
        $region165: #{tpu_custom_call.1} parent=11 // pred_region
          %s373 = sand.u32 1, 7
          %p374 = scmp.eq.s32.totalorder %s373, 0
          %p375 = pneg %p374
          // Predicated region
          $region178: #{tpu_custom_call.1} parent=165 // pred_check
            _
          $region179: #{tpu_custom_call.1} parent=165 // pred_check_branch
            %377 = sbr.rel (%p374) target = $region181
          $region180: #{tpu_custom_call.1} parent=165 // pred_region
            %s378 = sand.u32 1, 7
            %s379 = ssub.s32 1, %s378
            %s380 = scalar_lea.vmem %s351, %s379
            %s381 = ssub.s32 1, %s378
            %s382 = scalar_lea.vmem %s352, %s381 [#allocation2]
            %s383 = sshllo.u32 0, %s378
            loop: start=0, step=1, limit=1
            $region182: #{tpu_custom_call.1} parent=180 // loop_pre_header
              _
            $region183: #{tpu_custom_call.1} parent=180 // loop_header
              %s385 = sphi 0, %s389
              %p386 = scmp.ge.s32.totalorder %s385, 1
              %s390 = sphi %s380, %s380
              %s391 = sphi %s382, %s382
            $region184: #{tpu_custom_call.1} parent=180 // loop_header_branch
              %388 = sbr.rel (%p386) target = $region188
            $region185: #{tpu_custom_call.1} parent=180 // loop_body
              %v392 = vld [vmem:[%s390] sm:%s383]
              %393 = vst [vmem:[%s391] sm:%s383] %v392
            $region186: #{tpu_custom_call.1} parent=180 // loop_footer
              %s389 = sadd.s32 1, %s385
            $region187: #{tpu_custom_call.1} parent=180 // loop_footer_branch
              %384 = sbr.rel target = $region183
            $region188: #{tpu_custom_call.1} parent=180 // loop_exit
              _
          $region181: #{tpu_custom_call.1} parent=165 // pred_fallthru
            _
        $region166: #{tpu_custom_call.1} parent=11 // pred_fallthru
          _
        // Predicated region
        $region167: #{tpu_custom_call.1} parent=11 // pred_check
          %p359 = pneg %p355
        $region168: #{tpu_custom_call.1} parent=11 // pred_check_branch
          %361 = sbr.rel (%p359) target = $region170
        $region169: #{tpu_custom_call.1} parent=11 // pred_region
          %s362 = sshllo.u32 0, 1
          loop: start=0, step=1, limit=1
          $region171: #{tpu_custom_call.1} parent=169 // loop_pre_header
            _
          $region172: #{tpu_custom_call.1} parent=169 // loop_header
            %s364 = sphi 0, %s368
            %p365 = scmp.ge.s32.totalorder %s364, 1
            %s369 = sphi %s351, %s351
            %s370 = sphi %s352, %s352
          $region173: #{tpu_custom_call.1} parent=169 // loop_header_branch
            %367 = sbr.rel (%p365) target = $region177
          $region174: #{tpu_custom_call.1} parent=169 // loop_body
            %v371 = vld [vmem:[%s369] sm:%s362]
            %372 = vst [vmem:[%s370] sm:%s362] %v371
          $region175: #{tpu_custom_call.1} parent=169 // loop_footer
            %s368 = sadd.s32 1, %s364
          $region176: #{tpu_custom_call.1} parent=169 // loop_footer_branch
            %363 = sbr.rel target = $region172
          $region177: #{tpu_custom_call.1} parent=169 // loop_exit
            _
        $region170: #{tpu_custom_call.1} parent=11 // pred_fallthru
          _
        // Predicated region
        $region189: #{tpu_custom_call.1} parent=11 // pred_check
          _
        $region190: #{tpu_custom_call.1} parent=11 // pred_check_branch
          %396 = sbr.rel (0) target = $region192
        $region191: #{tpu_custom_call.1} parent=11 // pred_region
          %397 = vsyncadd %s353, 16
        $region192: #{tpu_custom_call.1} parent=11 // pred_fallthru
          _
        %s398 = sadd.s32 %s69, 6
        %s399 = sld [smem:[#allocation5 + %s398]]
        %p400 = scmp.lt.s32.totalorder %s399, %s64
        %p401 = scmp.ge.s32.totalorder %s399, %s68
        %p402 = por %p400, %p401
        %s403 = ssub.s32 %s399, %s64
        %s404 = scalar_select %p402, 32, %s403
        %s405 = sadd.s32 %s76, %s404
        %s406 = scalar_lea.vmem %s1, %s405
        %s407 = scalar_lea.vmem [#allocation2], 6
        %s408 = scalar_lea.sflag [#allocation3], 6
        %p410 = scmp.lt.u32.totalorder 1, 8
        %p411 = pneg %p410
        // Predicated region
        $region193: #{tpu_custom_call.1} parent=11 // pred_check
          _
        $region194: #{tpu_custom_call.1} parent=11 // pred_check_branch
          %413 = sbr.rel (%p410) target = $region196
        $region195: #{tpu_custom_call.1} parent=11 // pred_region
          %s428 = sand.u32 1, 7
          %p429 = scmp.eq.s32.totalorder %s428, 0
          %p430 = pneg %p429
          // Predicated region
          $region208: #{tpu_custom_call.1} parent=195 // pred_check
            _
          $region209: #{tpu_custom_call.1} parent=195 // pred_check_branch
            %432 = sbr.rel (%p429) target = $region211
          $region210: #{tpu_custom_call.1} parent=195 // pred_region
            %s433 = sand.u32 1, 7
            %s434 = ssub.s32 1, %s433
            %s435 = scalar_lea.vmem %s406, %s434
            %s436 = ssub.s32 1, %s433
            %s437 = scalar_lea.vmem %s407, %s436 [#allocation2]
            %s438 = sshllo.u32 0, %s433
            loop: start=0, step=1, limit=1
            $region212: #{tpu_custom_call.1} parent=210 // loop_pre_header
              _
            $region213: #{tpu_custom_call.1} parent=210 // loop_header
              %s440 = sphi 0, %s444
              %p441 = scmp.ge.s32.totalorder %s440, 1
              %s445 = sphi %s435, %s435
              %s446 = sphi %s437, %s437
            $region214: #{tpu_custom_call.1} parent=210 // loop_header_branch
              %443 = sbr.rel (%p441) target = $region218
            $region215: #{tpu_custom_call.1} parent=210 // loop_body
              %v447 = vld [vmem:[%s445] sm:%s438]
              %448 = vst [vmem:[%s446] sm:%s438] %v447
            $region216: #{tpu_custom_call.1} parent=210 // loop_footer
              %s444 = sadd.s32 1, %s440
            $region217: #{tpu_custom_call.1} parent=210 // loop_footer_branch
              %439 = sbr.rel target = $region213
            $region218: #{tpu_custom_call.1} parent=210 // loop_exit
              _
          $region211: #{tpu_custom_call.1} parent=195 // pred_fallthru
            _
        $region196: #{tpu_custom_call.1} parent=11 // pred_fallthru
          _
        // Predicated region
        $region197: #{tpu_custom_call.1} parent=11 // pred_check
          %p414 = pneg %p410
        $region198: #{tpu_custom_call.1} parent=11 // pred_check_branch
          %416 = sbr.rel (%p414) target = $region200
        $region199: #{tpu_custom_call.1} parent=11 // pred_region
          %s417 = sshllo.u32 0, 1
          loop: start=0, step=1, limit=1
          $region201: #{tpu_custom_call.1} parent=199 // loop_pre_header
            _
          $region202: #{tpu_custom_call.1} parent=199 // loop_header
            %s419 = sphi 0, %s423
            %p420 = scmp.ge.s32.totalorder %s419, 1
            %s424 = sphi %s406, %s406
            %s425 = sphi %s407, %s407
          $region203: #{tpu_custom_call.1} parent=199 // loop_header_branch
            %422 = sbr.rel (%p420) target = $region207
          $region204: #{tpu_custom_call.1} parent=199 // loop_body
            %v426 = vld [vmem:[%s424] sm:%s417]
            %427 = vst [vmem:[%s425] sm:%s417] %v426
          $region205: #{tpu_custom_call.1} parent=199 // loop_footer
            %s423 = sadd.s32 1, %s419
          $region206: #{tpu_custom_call.1} parent=199 // loop_footer_branch
            %418 = sbr.rel target = $region202
          $region207: #{tpu_custom_call.1} parent=199 // loop_exit
            _
        $region200: #{tpu_custom_call.1} parent=11 // pred_fallthru
          _
        // Predicated region
        $region219: #{tpu_custom_call.1} parent=11 // pred_check
          _
        $region220: #{tpu_custom_call.1} parent=11 // pred_check_branch
          %451 = sbr.rel (0) target = $region222
        $region221: #{tpu_custom_call.1} parent=11 // pred_region
          %452 = vsyncadd %s408, 16
        $region222: #{tpu_custom_call.1} parent=11 // pred_fallthru
          _
        %s453 = sadd.s32 %s69, 7
        %s454 = sld [smem:[#allocation5 + %s453]]
        %p455 = scmp.lt.s32.totalorder %s454, %s64
        %p456 = scmp.ge.s32.totalorder %s454, %s68
        %p457 = por %p455, %p456
        %s458 = ssub.s32 %s454, %s64
        %s459 = scalar_select %p457, 32, %s458
        %s460 = sadd.s32 %s76, %s459
        %s461 = scalar_lea.vmem %s1, %s460
        %s462 = scalar_lea.vmem [#allocation2], 7
        %s463 = scalar_lea.sflag [#allocation3], 7
        %p465 = scmp.lt.u32.totalorder 1, 8
        %p466 = pneg %p465
        // Predicated region
        $region223: #{tpu_custom_call.1} parent=11 // pred_check
          _
        $region224: #{tpu_custom_call.1} parent=11 // pred_check_branch
          %468 = sbr.rel (%p465) target = $region226
        $region225: #{tpu_custom_call.1} parent=11 // pred_region
          %s483 = sand.u32 1, 7
          %p484 = scmp.eq.s32.totalorder %s483, 0
          %p485 = pneg %p484
          // Predicated region
          $region238: #{tpu_custom_call.1} parent=225 // pred_check
            _
          $region239: #{tpu_custom_call.1} parent=225 // pred_check_branch
            %487 = sbr.rel (%p484) target = $region241
          $region240: #{tpu_custom_call.1} parent=225 // pred_region
            %s488 = sand.u32 1, 7
            %s489 = ssub.s32 1, %s488
            %s490 = scalar_lea.vmem %s461, %s489
            %s491 = ssub.s32 1, %s488
            %s492 = scalar_lea.vmem %s462, %s491 [#allocation2]
            %s493 = sshllo.u32 0, %s488
            loop: start=0, step=1, limit=1
            $region242: #{tpu_custom_call.1} parent=240 // loop_pre_header
              _
            $region243: #{tpu_custom_call.1} parent=240 // loop_header
              %s495 = sphi 0, %s499
              %p496 = scmp.ge.s32.totalorder %s495, 1
              %s500 = sphi %s490, %s490
              %s501 = sphi %s492, %s492
            $region244: #{tpu_custom_call.1} parent=240 // loop_header_branch
              %498 = sbr.rel (%p496) target = $region248
            $region245: #{tpu_custom_call.1} parent=240 // loop_body
              %v502 = vld [vmem:[%s500] sm:%s493]
              %503 = vst [vmem:[%s501] sm:%s493] %v502
            $region246: #{tpu_custom_call.1} parent=240 // loop_footer
              %s499 = sadd.s32 1, %s495
            $region247: #{tpu_custom_call.1} parent=240 // loop_footer_branch
              %494 = sbr.rel target = $region243
            $region248: #{tpu_custom_call.1} parent=240 // loop_exit
              _
          $region241: #{tpu_custom_call.1} parent=225 // pred_fallthru
            _
        $region226: #{tpu_custom_call.1} parent=11 // pred_fallthru
          _
        // Predicated region
        $region227: #{tpu_custom_call.1} parent=11 // pred_check
          %p469 = pneg %p465
        $region228: #{tpu_custom_call.1} parent=11 // pred_check_branch
          %471 = sbr.rel (%p469) target = $region230
        $region229: #{tpu_custom_call.1} parent=11 // pred_region
          %s472 = sshllo.u32 0, 1
          loop: start=0, step=1, limit=1
          $region231: #{tpu_custom_call.1} parent=229 // loop_pre_header
            _
          $region232: #{tpu_custom_call.1} parent=229 // loop_header
            %s474 = sphi 0, %s478
            %p475 = scmp.ge.s32.totalorder %s474, 1
            %s479 = sphi %s461, %s461
            %s480 = sphi %s462, %s462
          $region233: #{tpu_custom_call.1} parent=229 // loop_header_branch
            %477 = sbr.rel (%p475) target = $region237
          $region234: #{tpu_custom_call.1} parent=229 // loop_body
            %v481 = vld [vmem:[%s479] sm:%s472]
            %482 = vst [vmem:[%s480] sm:%s472] %v481
          $region235: #{tpu_custom_call.1} parent=229 // loop_footer
            %s478 = sadd.s32 1, %s474
          $region236: #{tpu_custom_call.1} parent=229 // loop_footer_branch
            %473 = sbr.rel target = $region232
          $region237: #{tpu_custom_call.1} parent=229 // loop_exit
            _
        $region230: #{tpu_custom_call.1} parent=11 // pred_fallthru
          _
        // Predicated region
        $region249: #{tpu_custom_call.1} parent=11 // pred_check
          _
        $region250: #{tpu_custom_call.1} parent=11 // pred_check_branch
          %506 = sbr.rel (0) target = $region252
        $region251: #{tpu_custom_call.1} parent=11 // pred_region
          %507 = vsyncadd %s463, 16
        $region252: #{tpu_custom_call.1} parent=11 // pred_fallthru
          _
        %s508 = smul.u32 1, 1
        %s509 = sshll.u32 %s508, 4
        %510 = dma.done [#allocation3], %s509
        %s511 = sshll.u32 %s508, 4
        %512 = dma.done %s133, %s511
        %s513 = sshll.u32 %s508, 4
        %514 = dma.done %s188, %s513
        %s515 = sshll.u32 %s508, 4
        %516 = dma.done %s243, %s515
        %s517 = sshll.u32 %s508, 4
        %518 = dma.done %s298, %s517
        %s519 = sshll.u32 %s508, 4
        %520 = dma.done %s353, %s519
        %s521 = sshll.u32 %s508, 4
        %522 = dma.done %s408, %s521
        %s523 = sshll.u32 %s508, 4
        %524 = dma.done %s463, %s523
        %p525 = scmp.eq.s32.totalorder %s24, 0
        // Predicated region
        $region253: #{tpu_custom_call.1} parent=11 // pred_check
          %p526 = pneg %p525
        $region254: #{tpu_custom_call.1} parent=11 // pred_check_branch
          %528 = sbr.rel (%p526) target = $region256
        $region255: #{tpu_custom_call.1} parent=11 // pred_region
          %vm529 = vcmask 261120
          %530 = vst.msk [vmem:[%s63] sm:$0xff] %vm529, 0.0
        $region256: #{tpu_custom_call.1} parent=11 // pred_fallthru
          _
        %v531 = vld [vmem:[%s63] sm:$0xff]
        %v532 = vld [vmem:[#allocation2] sm:$0xff]
        %v533 = vadd.f32 %v531, %v532
        %vm534 = vcmask 261120
        %535 = vst.msk [vmem:[%s63] sm:$0xff] %vm534, %v533
        %s536 = sand.u32 %s36, 1
        %s537 = scalar_lea.sflag [#allocation7], %s536
        %s538 = sand.u32 %s36, 1
        %s539 = smul.addr %s538, 8
        %s540 = scalar_lea.vmem [#allocation6], %s539
        // Predicated region
        $region257: #{tpu_custom_call.1} parent=11 // pred_check
          %p541 = pneg %p42
        $region258: #{tpu_custom_call.1} parent=11 // pred_check_branch
          %543 = sbr.rel (%p541) target = $region260
        $region259: #{tpu_custom_call.1} parent=11 // pred_region
          %s545 = ssub.s32 128, 128
          %546 = vsyncadd %s537, %s545
          %s547 = smul.addr %s23, 128
          %s548 = scalar_lea.hbm %s2, %s547
          %s550 = sshll.u32 %s540, 4
          %s551 = int_to_ptr.vmem [resolvable:$true] %s550
          %553 = dma.vmem_to_hbm [thread:$0]  %s551, 128, %s548, %s537
        $region260: #{tpu_custom_call.1} parent=11 // pred_fallthru
          _
      $region12: #{tpu_custom_call.1} parent=5 // pred_fallthru
        _
      %p554 = scmp.le.s32.totalorder 1, %s17
      // Predicated region
      $region261: #{tpu_custom_call.1} parent=5 // pred_check
        %p555 = pneg %p554
      $region262: #{tpu_custom_call.1} parent=5 // pred_check_branch
        %557 = sbr.rel (%p555) target = $region264
      $region263: #{tpu_custom_call.1} parent=5 // pred_region
        %s558 = ssub.s32 %s17, 1
        // Predicated region
        $region265: #{tpu_custom_call.1} parent=263 // pred_check
          %p559 = pneg %p48
        $region266: #{tpu_custom_call.1} parent=263 // pred_check_branch
          %561 = sbr.rel (%p559) target = $region268
        $region267: #{tpu_custom_call.1} parent=263 // pred_region
          %s562 = sand.u32 %s39, 1
          %s563 = scalar_lea.sflag [#allocation7], %s562
          %s564 = sand.u32 %s39, 1
          %s565 = smul.addr %s564, 8
          %s566 = scalar_lea.vmem [#allocation6], %s565
          %567 = dma.done %s563, 128
        $region268: #{tpu_custom_call.1} parent=263 // pred_fallthru
          _
      $region264: #{tpu_custom_call.1} parent=5 // pred_fallthru
        _
    $region6: #{tpu_custom_call.1} parent=1 // loop_footer
      %s21 = sadd.s32 1, %s17
    $region7: #{tpu_custom_call.1} parent=1 // loop_footer_branch
      %16 = sbr.rel target = $region3
    $region8: #{tpu_custom_call.1} parent=1 // loop_exit
      _
    %568 = vsyncpa [#allocation7], 1
    %s569 = scalar_lea.sflag [#allocation7], 1
    %570 = vsyncpa %s569, 1
  %571 = vsyncmov [#allocation3]
  %s572 = vpop.sfrf %571
  %p573 = scmp.eq.s32.totalorder %s572, 0
  %p574 = pneg %p573
  %576 = shalt.err (%p574)
  %s577 = scalar_lea.sflag [#allocation3], 1
  %578 = vsyncmov %s577
  %s579 = vpop.sfrf %578
  %p580 = scmp.eq.s32.totalorder %s579, 0
  %p581 = pneg %p580
  %583 = shalt.err (%p581)
  %s584 = scalar_lea.sflag [#allocation3], 2
  %585 = vsyncmov %s584
  %s586 = vpop.sfrf %585
  %p587 = scmp.eq.s32.totalorder %s586, 0
  %p588 = pneg %p587
  %590 = shalt.err (%p588)
  %s591 = scalar_lea.sflag [#allocation3], 3
  %592 = vsyncmov %s591
  %s593 = vpop.sfrf %592
  %p594 = scmp.eq.s32.totalorder %s593, 0
  %p595 = pneg %p594
  %597 = shalt.err (%p595)
  %s598 = scalar_lea.sflag [#allocation3], 4
  %599 = vsyncmov %s598
  %s600 = vpop.sfrf %599
  %p601 = scmp.eq.s32.totalorder %s600, 0
  %p602 = pneg %p601
  %604 = shalt.err (%p602)
  %s605 = scalar_lea.sflag [#allocation3], 5
  %606 = vsyncmov %s605
  %s607 = vpop.sfrf %606
  %p608 = scmp.eq.s32.totalorder %s607, 0
  %p609 = pneg %p608
  %611 = shalt.err (%p609)
  %s612 = scalar_lea.sflag [#allocation3], 6
  %613 = vsyncmov %s612
  %s614 = vpop.sfrf %613
  %p615 = scmp.eq.s32.totalorder %s614, 0
  %p616 = pneg %p615
  %618 = shalt.err (%p616)
  %s619 = scalar_lea.sflag [#allocation3], 7
  %620 = vsyncmov %s619
  %s621 = vpop.sfrf %620
  %p622 = scmp.eq.s32.totalorder %s621, 0
  %p623 = pneg %p622
  %625 = shalt.err (%p623)

</llo_original>
